<compile_context>
chip_gen: v5e
topology: v5e:2x2
jax: 0.10.0
libtpu: 0.0.40
codegen_flags: <defaults>
</compile_context>

<pallas_src>
import functools
import jax
import jax.numpy as jnp
from jax.experimental import pallas as pl
from jax.experimental.pallas import tpu as pltpu

# ---------------- model hyper-parameters (small, consistent with the module) ----------------
BATCH       = 2
N_TOKENS    = 8          # problem size (sequence length)
EMBED_DIM   = 32
HEAD_NUM    = 4
QKV_DIM     = 8          # head_num * qkv_dim == EMBED_DIM here
HEAD_DIM    = HEAD_NUM * QKV_DIM                  # 32
FF_HIDDEN   = 64
NUM_EXPERTS = 4
TOPK        = 2
PREF_DIM    = 8          # input_size_pref
EPS_NORM    = 1e-5       # nn.InstanceNorm1d default eps
XF          = NUM_EXPERTS * FF_HIDDEN             # 256 (stacked expert hidden width)
QKV_COLS    = 2 * HEAD_DIM + HEAD_NUM * EMBED_DIM  # 192 (Q | K | Wc-folded V)


# ================================ fused encoder-layer kernel ================================
def _instance_norm_tokens(a, gamma, beta):
    """InstanceNorm1d over tokens per channel (biased var, affine), restructured to
    per-channel scale/shift + a single a*scale + shift pass (halves VPU work/element)."""
    mu = jnp.mean(a, axis=0, keepdims=True)
    var = jnp.mean(a * a, axis=0, keepdims=True) - mu * mu
    scale = jax.lax.rsqrt(var + EPS_NORM) * gamma
    shift = beta - mu * scale
    return a * scale + shift


def encoder_layer_kernel(x_ref, wqkv_ref, w1c_ref, w2c_ref, const_ref, gate_ref, out_ref):
    f32 = jnp.float32
    xb = x_ref[0]                                  # (N, E): this grid step's batch

    consts = const_ref[...]                        # (5, XF) packed constant slab
    b1c = consts[0:1, :]                           # (1, XF)  stacked expert-1 bias
    g1  = consts[1:2, :EMBED_DIM]                  # (1, E)   norm1 gamma
    be1 = consts[2:3, :EMBED_DIM]                  # (1, E)   norm1 beta
    g2  = consts[3:4, :EMBED_DIM]                  # (1, E)   norm2 gamma
    be2 = consts[4:5, :EMBED_DIM]                  # (1, E)   norm2 beta
    gsc = gate_ref[0]                              # (1, XF)  this batch's expert gates (F-repeated)

    # ---- fused projection: one MXU call -> [Q/sqrt(d) | K | Wc-folded V'] ----
    qkv = jnp.dot(xb, wqkv_ref[...], preferred_element_type=f32)       # (N, 192)

    # ---- per-head scores, stacked -> ONE softmax chain over (H*N, N) ----
    dn_qkT = (((1,), (1,)), ((), ()))              # q @ k^T (contract last dims)
    scores = [
        jax.lax.dot_general(
            qkv[:, h * QKV_DIM:(h + 1) * QKV_DIM],                       # Q_h (N, D)
            qkv[:, HEAD_DIM + h * QKV_DIM:HEAD_DIM + (h + 1) * QKV_DIM],  # K_h (N, D)
            dn_qkT, preferred_element_type=f32)
        for h in range(HEAD_NUM)
    ]
    s = jnp.concatenate(scores, axis=0)            # (H*N, N) — sublane-aligned stack
    s = s - jnp.max(s, axis=-1, keepdims=True)
    p = jnp.exp(s)
    # exact reciprocal keeps the 2e-4 tolerance; set approx=True to use the idle EUP slot.
    p = p * pl.reciprocal(jnp.sum(p, axis=-1, keepdims=True), approx=False)

    # ---- attention output with multi_head_combine already folded into V' (E-wide slices) ----
    mh = jnp.zeros((N_TOKENS, EMBED_DIM), f32)
    v_off = 2 * HEAD_DIM
    for h in range(HEAD_NUM):                      # static unroll, H tiny
        mh = mh + jnp.dot(p[h * N_TOKENS:(h + 1) * N_TOKENS, :],        # P_h (N, N) sublane slice
                          qkv[:, v_off + h * EMBED_DIM:v_off + (h + 1) * EMBED_DIM],  # V'_h (N, E)
                          preferred_element_type=f32)

    # Add & Norm 1  (combine bias bc dropped: per-channel constant over tokens cancels in the norm)
    out1 = _instance_norm_tokens(xb + mh, g1, be1)

    # ---- MoE FFN: all experts fused into two lane-dense matmuls + one gate multiply ----
    h1 = jnp.dot(out1, w1c_ref[...], preferred_element_type=f32) + b1c  # (N, XF)
    h1 = jnp.maximum(h1, 0.0) * gsc                                     # ReLU + expert gating
    y = jnp.dot(h1, w2c_ref[...], preferred_element_type=f32)           # (N, E)

    # Add & Norm 2  (gates@b2 bias dropped: also a per-channel constant over tokens -> cancels)
    out_ref[0] = _instance_norm_tokens(out1 + y, g2, be2)


# ================================ glue: gating + full encoder layer ================================
def topk_gating(pref, wg, k):
    """Deterministic (eval-mode) noisy-top-k gating: softmax over the top-k logits."""
    logits = pref @ wg                                                  # (B, num_experts)
    top_vals, top_idx = jax.lax.top_k(logits, k)
    top_p = jax.nn.softmax(top_vals, axis=-1)
    gates = jnp.zeros_like(logits)
    gates = gates.at[jnp.arange(logits.shape[0])[:, None], top_idx].set(top_p)
    importance = gates.sum(axis=0)
    moe_loss = jnp.var(importance, ddof=1) / (jnp.mean(importance) ** 2 + 1e-10)
    return gates, moe_loss


def encoder_layer(params, input1, mid_embd_pref):
    B, N, E = input1.shape
    gates, moe_loss = topk_gating(mid_embd_pref, params["wg"], TOPK)

    # ---- weight prep (constant-folds under jit because params are baked into the closure) ----
    # TODO(synk): when params become runtime args (training), hoist this block out of the step jit.
    inv_sqrt_d = 1.0 / jnp.sqrt(jnp.float32(QKV_DIM))
    wv_heads = params["wv"].reshape(E, HEAD_NUM, QKV_DIM)               # (E, H, D)
    wc_heads = params["wc"].reshape(HEAD_NUM, QKV_DIM, E)               # (H, D, E)
    wv_folded = jnp.einsum("ehd,hdf->ehf", wv_heads, wc_heads).reshape(E, HEAD_NUM * E)
    wqkv = jnp.concatenate([params["wq"] * inv_sqrt_d, params["wk"], wv_folded], axis=1)  # (E, 192)

    w1c = jnp.transpose(params["w1"], (1, 0, 2)).reshape(E, XF)         # (E, X*F)
    w2c = params["w2"].reshape(XF, E)                                   # (X*F, E)
    b1c = params["b1"].reshape(1, XF)                                   # (1, X*F)

    pad = lambda v: jnp.pad(v, ((0, 0), (0, XF - v.shape[1])))
    consts = jnp.concatenate(                                           # packed (5, XF) slab
        [b1c, pad(params["g1"]), pad(params["be1"]), pad(params["g2"]), pad(params["be2"])],
        axis=0)
    gate_scale = jnp.repeat(gates, FF_HIDDEN, axis=1).reshape(B, 1, XF)  # per-batch gate vector

    out = pl.pallas_call(
        encoder_layer_kernel,
        out_shape=jax.ShapeDtypeStruct((B, N, E), jnp.float32),
        grid=(B,),                                                       # batch grid (v7x: 2 TCs)
        in_specs=[
            pl.BlockSpec((1, N, E), lambda b: (b, 0, 0)),                # x: one batch per step
            pl.BlockSpec((E, QKV_COLS), lambda b: (0, 0)),               # weights: fetched once,
            pl.BlockSpec((E, XF), lambda b: (0, 0)),                     #   VMEM-resident across
            pl.BlockSpec((XF, E), lambda b: (0, 0)),                     #   grid steps
            pl.BlockSpec((5, XF), lambda b: (0, 0)),                     # packed constants
            pl.BlockSpec((1, 1, XF), lambda b: (b, 0, 0)),               # per-batch gates
        ],
        out_specs=pl.BlockSpec((1, N, E), lambda b: (b, 0, 0)),
        compiler_params=pltpu.CompilerParams(dimension_semantics=("parallel",)),
    )(input1, wqkv, w1c, w2c, consts, gate_scale)
    return out, moe_loss


# ================================ pure-JAX reference (for sanity check) ================================
def encoder_layer_ref(params, x, pref):
    def inorm(a, g, b):
        mean = a.mean(axis=1, keepdims=True)
        var = ((a - mean) ** 2).mean(axis=1, keepdims=True)
        return (a - mean) / jnp.sqrt(var + EPS_NORM) * g + b

    q = x @ params["wq"]; k = x @ params["wk"]; v = x @ params["wv"]
    B, N, _ = x.shape
    rh = lambda t: t.reshape(B, N, HEAD_NUM, QKV_DIM).transpose(0, 2, 1, 3)
    qh, kh, vh = rh(q), rh(k), rh(v)
    s = jnp.einsum("bhnd,bhmd->bhnm", qh, kh) / jnp.sqrt(jnp.float32(QKV_DIM))
    w = jax.nn.softmax(s, axis=-1)
    o = jnp.einsum("bhnm,bhmd->bhnd", w, vh).transpose(0, 2, 1, 3).reshape(B, N, -1)
    mh = o @ params["wc"] + params["bc"][0]
    out1 = inorm(x + mh, params["g1"][0], params["be1"][0])

    gates, moe_loss = topk_gating(pref, params["wg"], TOPK)
    moe = jnp.zeros_like(out1)
    for e in range(NUM_EXPERTS):
        h = jax.nn.relu(out1 @ params["w1"][e] + params["b1"][e])
        moe = moe + gates[:, e][:, None, None] * (h @ params["w2"][e] + params["b2"][e])
    out3 = inorm(out1 + moe, params["g2"][0], params["be2"][0])
    return out3, moe_loss


# ================================ main ================================
def init_params(key):
    ks = jax.random.split(key, 10)
    HD = HEAD_NUM * QKV_DIM
    s = 0.1
    return {
        "wq": s * jax.random.normal(ks[0], (EMBED_DIM, HD), jnp.float32),
        "wk": s * jax.random.normal(ks[1], (EMBED_DIM, HD), jnp.float32),
        "wv": s * jax.random.normal(ks[2], (EMBED_DIM, HD), jnp.float32),
        "wc": s * jax.random.normal(ks[3], (HD, EMBED_DIM), jnp.float32),
        "bc": s * jax.random.normal(ks[4], (1, EMBED_DIM), jnp.float32),
        "g1": jnp.ones((1, EMBED_DIM), jnp.float32),
        "be1": jnp.zeros((1, EMBED_DIM), jnp.float32),
        "wg": s * jax.random.normal(ks[5], (PREF_DIM, NUM_EXPERTS), jnp.float32),
        "w1": s * jax.random.normal(ks[6], (NUM_EXPERTS, EMBED_DIM, FF_HIDDEN), jnp.float32),
        "b1": s * jax.random.normal(ks[7], (NUM_EXPERTS, FF_HIDDEN), jnp.float32),
        "w2": s * jax.random.normal(ks[8], (NUM_EXPERTS, FF_HIDDEN, EMBED_DIM), jnp.float32),
        "b2": s * jax.random.normal(ks[9], (NUM_EXPERTS, EMBED_DIM), jnp.float32),
        "g2": jnp.ones((1, EMBED_DIM), jnp.float32),
        "be2": jnp.zeros((1, EMBED_DIM), jnp.float32),
    }


if __name__ == "__main__":
    key = jax.random.PRNGKey(0)
    kp, kx, kpref = jax.random.split(key, 3)
    params = init_params(kp)
    input1 = jax.random.normal(kx, (BATCH, N_TOKENS, EMBED_DIM), jnp.float32)
    mid_embd_pref = jax.random.normal(kpref, (BATCH, PREF_DIM), jnp.float32)

    fwd = jax.jit(functools.partial(encoder_layer, params))
    out3, moe_loss = fwd(input1, mid_embd_pref)
    jax.block_until_ready((out3, moe_loss))

    ref_out, ref_loss = encoder_layer_ref(params, input1, mid_embd_pref)
    assert out3.shape == (BATCH, N_TOKENS, EMBED_DIM)
    assert jnp.allclose(out3, ref_out, atol=2e-4, rtol=2e-4), "kernel/reference mismatch"
    assert jnp.allclose(moe_loss, ref_loss, atol=1e-6)

    print("KERNEL_OK")
</pallas_src>

<mosaic_0001>
module attributes {stable_mosaic.version = 11 : i64} {
  func.func @encoder_layer_kernel(%arg0: i32, %arg1: memref<1x8x32xf32, #tpu.memory_space<vmem>>, %arg2: memref<32x192xf32, #tpu.memory_space<vmem>>, %arg3: memref<32x256xf32, #tpu.memory_space<vmem>>, %arg4: memref<256x32xf32, #tpu.memory_space<vmem>>, %arg5: memref<5x256xf32, #tpu.memory_space<vmem>>, %arg6: memref<1x1x256xf32, #tpu.memory_space<vmem>>, %arg7: memref<1x8x32xf32, #tpu.memory_space<vmem>>) attributes {dimension_semantics = [#tpu.dimension_semantics<parallel>], iteration_bounds = array<i64: 2>, scalar_prefetch = 0 : i64, scratch_operands = 0 : i64, tpu.core_type = #tpu.core_type<tc>, window_params = [{transform_indices = @transform_0, window_bounds = array<i64: 1, 8, 32>}, {pipeline_mode = #tpu.pipeline_mode<synchronous>, transform_indices = @transform_1, window_bounds = array<i64: 32, 192>}, {pipeline_mode = #tpu.pipeline_mode<synchronous>, transform_indices = @transform_2, window_bounds = array<i64: 32, 256>}, {pipeline_mode = #tpu.pipeline_mode<synchronous>, transform_indices = @transform_3, window_bounds = array<i64: 256, 32>}, {pipeline_mode = #tpu.pipeline_mode<synchronous>, transform_indices = @transform_4, window_bounds = array<i64: 5, 256>}, {transform_indices = @transform_5, window_bounds = array<i64: 1, 1, 256>}, {transform_indices = @transform_6, window_bounds = array<i64: 1, 8, 32>}]} {
    %c0 = arith.constant 0 : index
    %c0_0 = arith.constant 0 : index
    %c0_1 = arith.constant 0 : index
    %0 = vector.load %arg1[%c0, %c0_0, %c0_1] : memref<1x8x32xf32, #tpu.memory_space<vmem>>, vector<1x8x32xf32>
    %1 = vector.shape_cast %0 : vector<1x8x32xf32> to vector<8x32xf32>
    %c0_2 = arith.constant 0 : index
    %c0_3 = arith.constant 0 : index
    %2 = vector.load %arg5[%c0_2, %c0_3] : memref<5x256xf32, #tpu.memory_space<vmem>>, vector<5x256xf32>
    %3 = vector.extract_strided_slice %2 {offsets = [0, 0], sizes = [1, 256], strides = [1, 1]} : vector<5x256xf32> to vector<1x256xf32>
    %4 = vector.extract_strided_slice %2 {offsets = [1, 0], sizes = [1, 32], strides = [1, 1]} : vector<5x256xf32> to vector<1x32xf32>
    %5 = vector.extract_strided_slice %2 {offsets = [2, 0], sizes = [1, 32], strides = [1, 1]} : vector<5x256xf32> to vector<1x32xf32>
    %6 = vector.extract_strided_slice %2 {offsets = [3, 0], sizes = [1, 32], strides = [1, 1]} : vector<5x256xf32> to vector<1x32xf32>
    %7 = vector.extract_strided_slice %2 {offsets = [4, 0], sizes = [1, 32], strides = [1, 1]} : vector<5x256xf32> to vector<1x32xf32>
    %c0_4 = arith.constant 0 : index
    %c0_5 = arith.constant 0 : index
    %c0_6 = arith.constant 0 : index
    %8 = vector.load %arg6[%c0_4, %c0_5, %c0_6] : memref<1x1x256xf32, #tpu.memory_space<vmem>>, vector<1x1x256xf32>
    %9 = vector.shape_cast %8 : vector<1x1x256xf32> to vector<1x256xf32>
    %c0_7 = arith.constant 0 : index
    %c0_8 = arith.constant 0 : index
    %10 = vector.load %arg2[%c0_7, %c0_8] : memref<32x192xf32, #tpu.memory_space<vmem>>, vector<32x192xf32>
    %cst = arith.constant dense<0.000000e+00> : vector<8x192xf32>
    %11 = tpu.matmul %1, %10, %cst {dimension_numbers = #tpu.dot_dimension_numbers<[1], [0], [0], [1], [0, 0, 1, 1], [], []>} : vector<8x32xf32>, vector<32x192xf32>, vector<8x192xf32> -> vector<8x192xf32>
    %12 = vector.extract_strided_slice %11 {offsets = [0, 0], sizes = [8, 8], strides = [1, 1]} : vector<8x192xf32> to vector<8x8xf32>
    %13 = vector.extract_strided_slice %11 {offsets = [0, 32], sizes = [8, 8], strides = [1, 1]} : vector<8x192xf32> to vector<8x8xf32>
    %cst_9 = arith.constant dense<0.000000e+00> : vector<8x8xf32>
    %14 = tpu.matmul %12, %13, %cst_9 {dimension_numbers = #tpu.dot_dimension_numbers<[1], [1], [0], [0], [0, 0, 1, 0], [], []>} : vector<8x8xf32>, vector<8x8xf32>, vector<8x8xf32> -> vector<8x8xf32>
    %15 = vector.extract_strided_slice %11 {offsets = [0, 8], sizes = [8, 8], strides = [1, 1]} : vector<8x192xf32> to vector<8x8xf32>
    %16 = vector.extract_strided_slice %11 {offsets = [0, 40], sizes = [8, 8], strides = [1, 1]} : vector<8x192xf32> to vector<8x8xf32>
    %cst_10 = arith.constant dense<0.000000e+00> : vector<8x8xf32>
    %17 = tpu.matmul %15, %16, %cst_10 {dimension_numbers = #tpu.dot_dimension_numbers<[1], [1], [0], [0], [0, 0, 1, 0], [], []>} : vector<8x8xf32>, vector<8x8xf32>, vector<8x8xf32> -> vector<8x8xf32>
    %18 = vector.extract_strided_slice %11 {offsets = [0, 16], sizes = [8, 8], strides = [1, 1]} : vector<8x192xf32> to vector<8x8xf32>
    %19 = vector.extract_strided_slice %11 {offsets = [0, 48], sizes = [8, 8], strides = [1, 1]} : vector<8x192xf32> to vector<8x8xf32>
    %cst_11 = arith.constant dense<0.000000e+00> : vector<8x8xf32>
    %20 = tpu.matmul %18, %19, %cst_11 {dimension_numbers = #tpu.dot_dimension_numbers<[1], [1], [0], [0], [0, 0, 1, 0], [], []>} : vector<8x8xf32>, vector<8x8xf32>, vector<8x8xf32> -> vector<8x8xf32>
    %21 = vector.extract_strided_slice %11 {offsets = [0, 24], sizes = [8, 8], strides = [1, 1]} : vector<8x192xf32> to vector<8x8xf32>
    %22 = vector.extract_strided_slice %11 {offsets = [0, 56], sizes = [8, 8], strides = [1, 1]} : vector<8x192xf32> to vector<8x8xf32>
    %cst_12 = arith.constant dense<0.000000e+00> : vector<8x8xf32>
    %23 = tpu.matmul %21, %22, %cst_12 {dimension_numbers = #tpu.dot_dimension_numbers<[1], [1], [0], [0], [0, 0, 1, 0], [], []>} : vector<8x8xf32>, vector<8x8xf32>, vector<8x8xf32> -> vector<8x8xf32>
    %24 = tpu.concatenate %14, %17, %20, %23 in 0 : vector<8x8xf32>, vector<8x8xf32>, vector<8x8xf32>, vector<8x8xf32> -> vector<32x8xf32>
    %cst_13 = arith.constant dense<0xFF800000> : vector<32xf32>
    %25 = vector.multi_reduction <maximumf>, %24, %cst_13 [1] : vector<32x8xf32> to vector<32xf32>
    %26 = vector.shape_cast %25 : vector<32xf32> to vector<32x1xf32>
    %27 = vector.broadcast %26 : vector<32x1xf32> to vector<32x8xf32>
    %28 = arith.subf %24, %27 : vector<32x8xf32>
    %29 = math.exp %28 : vector<32x8xf32>
    %cst_14 = arith.constant dense<0.000000e+00> : vector<32xf32>
    %30 = vector.multi_reduction <add>, %29, %cst_14 [1] : vector<32x8xf32> to vector<32xf32>
    %31 = vector.shape_cast %30 : vector<32xf32> to vector<32x1xf32>
    %32 = tpu.reciprocal %31 : vector<32x1xf32> -> vector<32x1xf32>
    %33 = vector.broadcast %32 : vector<32x1xf32> to vector<32x8xf32>
    %34 = arith.mulf %29, %33 : vector<32x8xf32>
    %cst_15 = arith.constant 0.000000e+00 : f32
    %35 = vector.broadcast %cst_15 : f32 to vector<8x32xf32>
    %36 = vector.extract_strided_slice %34 {offsets = [0, 0], sizes = [8, 8], strides = [1, 1]} : vector<32x8xf32> to vector<8x8xf32>
    %37 = vector.extract_strided_slice %11 {offsets = [0, 64], sizes = [8, 32], strides = [1, 1]} : vector<8x192xf32> to vector<8x32xf32>
    %cst_16 = arith.constant dense<0.000000e+00> : vector<8x32xf32>
    %38 = tpu.matmul %36, %37, %cst_16 {dimension_numbers = #tpu.dot_dimension_numbers<[1], [0], [0], [1], [0, 0, 1, 1], [], []>} : vector<8x8xf32>, vector<8x32xf32>, vector<8x32xf32> -> vector<8x32xf32>
    %39 = arith.addf %35, %38 : vector<8x32xf32>
    %40 = vector.extract_strided_slice %34 {offsets = [8, 0], sizes = [8, 8], strides = [1, 1]} : vector<32x8xf32> to vector<8x8xf32>
    %41 = vector.extract_strided_slice %11 {offsets = [0, 96], sizes = [8, 32], strides = [1, 1]} : vector<8x192xf32> to vector<8x32xf32>
    %cst_17 = arith.constant dense<0.000000e+00> : vector<8x32xf32>
    %42 = tpu.matmul %40, %41, %cst_17 {dimension_numbers = #tpu.dot_dimension_numbers<[1], [0], [0], [1], [0, 0, 1, 1], [], []>} : vector<8x8xf32>, vector<8x32xf32>, vector<8x32xf32> -> vector<8x32xf32>
    %43 = arith.addf %39, %42 : vector<8x32xf32>
    %44 = vector.extract_strided_slice %34 {offsets = [16, 0], sizes = [8, 8], strides = [1, 1]} : vector<32x8xf32> to vector<8x8xf32>
    %45 = vector.extract_strided_slice %11 {offsets = [0, 128], sizes = [8, 32], strides = [1, 1]} : vector<8x192xf32> to vector<8x32xf32>
    %cst_18 = arith.constant dense<0.000000e+00> : vector<8x32xf32>
    %46 = tpu.matmul %44, %45, %cst_18 {dimension_numbers = #tpu.dot_dimension_numbers<[1], [0], [0], [1], [0, 0, 1, 1], [], []>} : vector<8x8xf32>, vector<8x32xf32>, vector<8x32xf32> -> vector<8x32xf32>
    %47 = arith.addf %43, %46 : vector<8x32xf32>
    %48 = vector.extract_strided_slice %34 {offsets = [24, 0], sizes = [8, 8], strides = [1, 1]} : vector<32x8xf32> to vector<8x8xf32>
    %49 = vector.extract_strided_slice %11 {offsets = [0, 160], sizes = [8, 32], strides = [1, 1]} : vector<8x192xf32> to vector<8x32xf32>
    %cst_19 = arith.constant dense<0.000000e+00> : vector<8x32xf32>
    %50 = tpu.matmul %48, %49, %cst_19 {dimension_numbers = #tpu.dot_dimension_numbers<[1], [0], [0], [1], [0, 0, 1, 1], [], []>} : vector<8x8xf32>, vector<8x32xf32>, vector<8x32xf32> -> vector<8x32xf32>
    %51 = arith.addf %47, %50 : vector<8x32xf32>
    %52 = arith.addf %1, %51 : vector<8x32xf32>
    %cst_20 = arith.constant dense<0.000000e+00> : vector<32xf32>
    %53 = vector.multi_reduction <add>, %52, %cst_20 [0] : vector<8x32xf32> to vector<32xf32>
    %54 = vector.shape_cast %53 : vector<32xf32> to vector<1x32xf32>
    %cst_21 = arith.constant 8.000000e+00 : f32
    %55 = vector.broadcast %cst_21 : f32 to vector<1x32xf32>
    %56 = arith.divf %54, %55 : vector<1x32xf32>
    %57 = arith.mulf %52, %52 : vector<8x32xf32>
    %cst_22 = arith.constant dense<0.000000e+00> : vector<32xf32>
    %58 = vector.multi_reduction <add>, %57, %cst_22 [0] : vector<8x32xf32> to vector<32xf32>
    %59 = vector.shape_cast %58 : vector<32xf32> to vector<1x32xf32>
    %cst_23 = arith.constant 8.000000e+00 : f32
    %60 = vector.broadcast %cst_23 : f32 to vector<1x32xf32>
    %61 = arith.divf %59, %60 : vector<1x32xf32>
    %62 = arith.mulf %56, %56 : vector<1x32xf32>
    %63 = arith.subf %61, %62 : vector<1x32xf32>
    %cst_24 = arith.constant 9.99999974E-6 : f32
    %64 = vector.broadcast %cst_24 : f32 to vector<1x32xf32>
    %65 = arith.addf %63, %64 : vector<1x32xf32>
    %66 = math.rsqrt %65 : vector<1x32xf32>
    %67 = arith.mulf %66, %4 : vector<1x32xf32>
    %68 = arith.mulf %56, %67 : vector<1x32xf32>
    %69 = arith.subf %5, %68 : vector<1x32xf32>
    %70 = vector.broadcast %67 : vector<1x32xf32> to vector<8x32xf32>
    %71 = arith.mulf %52, %70 : vector<8x32xf32>
    %72 = vector.broadcast %69 : vector<1x32xf32> to vector<8x32xf32>
    %73 = arith.addf %71, %72 : vector<8x32xf32>
    %c0_25 = arith.constant 0 : index
    %c0_26 = arith.constant 0 : index
    %74 = vector.load %arg3[%c0_25, %c0_26] : memref<32x256xf32, #tpu.memory_space<vmem>>, vector<32x256xf32>
    %cst_27 = arith.constant dense<0.000000e+00> : vector<8x256xf32>
    %75 = tpu.matmul %73, %74, %cst_27 {dimension_numbers = #tpu.dot_dimension_numbers<[1], [0], [0], [1], [0, 0, 1, 1], [], []>} : vector<8x32xf32>, vector<32x256xf32>, vector<8x256xf32> -> vector<8x256xf32>
    %76 = vector.broadcast %3 : vector<1x256xf32> to vector<8x256xf32>
    %77 = arith.addf %75, %76 : vector<8x256xf32>
    %cst_28 = arith.constant 0.000000e+00 : f32
    %78 = vector.broadcast %cst_28 : f32 to vector<8x256xf32>
    %79 = arith.maximumf %77, %78 : vector<8x256xf32>
    %80 = vector.broadcast %9 : vector<1x256xf32> to vector<8x256xf32>
    %81 = arith.mulf %79, %80 : vector<8x256xf32>
    %c0_29 = arith.constant 0 : index
    %c0_30 = arith.constant 0 : index
    %82 = vector.load %arg4[%c0_29, %c0_30] : memref<256x32xf32, #tpu.memory_space<vmem>>, vector<256x32xf32>
    %cst_31 = arith.constant dense<0.000000e+00> : vector<8x32xf32>
    %83 = tpu.matmul %81, %82, %cst_31 {dimension_numbers = #tpu.dot_dimension_numbers<[1], [0], [0], [1], [0, 0, 1, 1], [], []>} : vector<8x256xf32>, vector<256x32xf32>, vector<8x32xf32> -> vector<8x32xf32>
    %84 = arith.addf %73, %83 : vector<8x32xf32>
    %cst_32 = arith.constant dense<0.000000e+00> : vector<32xf32>
    %85 = vector.multi_reduction <add>, %84, %cst_32 [0] : vector<8x32xf32> to vector<32xf32>
    %86 = vector.shape_cast %85 : vector<32xf32> to vector<1x32xf32>
    %cst_33 = arith.constant 8.000000e+00 : f32
    %87 = vector.broadcast %cst_33 : f32 to vector<1x32xf32>
    %88 = arith.divf %86, %87 : vector<1x32xf32>
    %89 = arith.mulf %84, %84 : vector<8x32xf32>
    %cst_34 = arith.constant dense<0.000000e+00> : vector<32xf32>
    %90 = vector.multi_reduction <add>, %89, %cst_34 [0] : vector<8x32xf32> to vector<32xf32>
    %91 = vector.shape_cast %90 : vector<32xf32> to vector<1x32xf32>
    %cst_35 = arith.constant 8.000000e+00 : f32
    %92 = vector.broadcast %cst_35 : f32 to vector<1x32xf32>
    %93 = arith.divf %91, %92 : vector<1x32xf32>
    %94 = arith.mulf %88, %88 : vector<1x32xf32>
    %95 = arith.subf %93, %94 : vector<1x32xf32>
    %cst_36 = arith.constant 9.99999974E-6 : f32
    %96 = vector.broadcast %cst_36 : f32 to vector<1x32xf32>
    %97 = arith.addf %95, %96 : vector<1x32xf32>
    %98 = math.rsqrt %97 : vector<1x32xf32>
    %99 = arith.mulf %98, %6 : vector<1x32xf32>
    %100 = arith.mulf %88, %99 : vector<1x32xf32>
    %101 = arith.subf %7, %100 : vector<1x32xf32>
    %102 = vector.broadcast %99 : vector<1x32xf32> to vector<8x32xf32>
    %103 = arith.mulf %84, %102 : vector<8x32xf32>
    %104 = vector.broadcast %101 : vector<1x32xf32> to vector<8x32xf32>
    %105 = arith.addf %103, %104 : vector<8x32xf32>
    %c0_37 = arith.constant 0 : index
    %c0_38 = arith.constant 0 : index
    %c0_39 = arith.constant 0 : index
    %106 = vector.load %arg7[%c0_37, %c0_38, %c0_39] : memref<1x8x32xf32, #tpu.memory_space<vmem>>, vector<1x8x32xf32>
    %107 = vector.shape_cast %106 : vector<1x8x32xf32> to vector<8x32xf32>
    %108 = vector.shape_cast %105 : vector<8x32xf32> to vector<1x8x32xf32>
    tpu.vector_store %arg7[%c0_37, %c0_38, %c0_39], %108 {strides = array<i32>} : memref<1x8x32xf32, #tpu.memory_space<vmem>>, vector<1x8x32xf32>,
    return
  }
  func.func @transform_0(%arg0: i32) -> (i32, i32, i32) {
    %c0_i32 = arith.constant 0 : i32
    %c0_i32_0 = arith.constant 0 : i32
    %c0_i32_1 = arith.constant 0 : i32
    return %arg0, %c0_i32, %c0_i32_0 : i32, i32, i32
  }
  func.func @transform_1(%arg0: i32) -> (i32, i32) {
    %c0_i32 = arith.constant 0 : i32
    %c0_i32_0 = arith.constant 0 : i32
    %c0_i32_1 = arith.constant 0 : i32
    return %c0_i32, %c0_i32_0 : i32, i32
  }
  func.func @transform_2(%arg0: i32) -> (i32, i32) {
    %c0_i32 = arith.constant 0 : i32
    %c0_i32_0 = arith.constant 0 : i32
    %c0_i32_1 = arith.constant 0 : i32
    return %c0_i32, %c0_i32_0 : i32, i32
  }
  func.func @transform_3(%arg0: i32) -> (i32, i32) {
    %c0_i32 = arith.constant 0 : i32
    %c0_i32_0 = arith.constant 0 : i32
    %c0_i32_1 = arith.constant 0 : i32
    return %c0_i32, %c0_i32_0 : i32, i32
  }
  func.func @transform_4(%arg0: i32) -> (i32, i32) {
    %c0_i32 = arith.constant 0 : i32
    %c0_i32_0 = arith.constant 0 : i32
    %c0_i32_1 = arith.constant 0 : i32
    return %c0_i32, %c0_i32_0 : i32, i32
  }
  func.func @transform_5(%arg0: i32) -> (i32, i32, i32) {
    %c0_i32 = arith.constant 0 : i32
    %c0_i32_0 = arith.constant 0 : i32
    %c0_i32_1 = arith.constant 0 : i32
    return %arg0, %c0_i32, %c0_i32_0 : i32, i32, i32
  }
  func.func @transform_6(%arg0: i32) -> (i32, i32, i32) {
    %c0_i32 = arith.constant 0 : i32
    %c0_i32_0 = arith.constant 0 : i32
    %c0_i32_1 = arith.constant 0 : i32
    return %arg0, %c0_i32, %c0_i32_0 : i32, i32, i32
  }
}

</mosaic_0001>

<llo_original>
// kernel: encoder_layer.1
$region0: #{encoder_layer.1}
  #allocation0 [shape = 'u32[]', space=smem, size = 0x4, offset = 0x4, fixed_abs, tag = 'smem constant byte address 0x4 - core index']
  #allocation1 [shape = 'u32[72,128]{1,0:T(1,128)}', space=vmem, size = 0x9000, scoped, tag = 'internal scratch']
  %s0 = inlined_call_operand.vmem [shape: f32[2,8,32], index: 0, kind: input, shape index: {}]
  %s1 = inlined_call_operand.vmem [shape: f32[32,192], index: 1, kind: input, shape index: {}]
  %s2 = inlined_call_operand.vmem [shape: f32[32,256], index: 2, kind: input, shape index: {}]
  %s3 = inlined_call_operand.vmem [shape: f32[256,32], index: 3, kind: input, shape index: {}]
  %s4 = inlined_call_operand.vmem [shape: f32[5,256], index: 4, kind: input, shape index: {}]
  %s5 = inlined_call_operand.vmem [shape: f32[2,1,256], index: 5, kind: input, shape index: {}]
  %s6 = inlined_call_operand.hbm [shape: f32[2,8,32], index: 6, kind: output, shape index: {}]
  %s7 = sld [smem:[#allocation0]]
  $region57: #{encoder_layer.1} parent=0
    _
  %s9 = ssub.s32 1, %s7
  %s10 = scalar_select 0, %s9, %s7
  $region1: #{encoder_layer.1} parent=0
    #allocation2 [shape = 'u8[8192]{0}', space=vmem, size = 0x2000, scoped, tag = 'output window, operand 0']
    #allocation3 [shape = 's32[2]{0}', space=sflag, size = 0x8, scoped, tag = 'scoped memory for encoder_layer.1']
    %11 = vsyncpa [#allocation3], 0
    %s12 = scalar_lea.sflag [#allocation3], 1
    %13 = vsyncpa %s12, 0
    loop: start=0, step=1, limit=4
    $region2: #{encoder_layer.1} parent=1 // loop_pre_header
      _
    $region3: #{encoder_layer.1} parent=1 // loop_header
      %s15 = sphi 0, %s19
      %p16 = scmp.ge.s32.totalorder %s15, 4
      %s25 = sphi 0, %s27
      %s28 = sphi 0, %s25
      %s29 = sphi 0, %s28
      %s45 = sphi 0, %s29
      %s49 = sphi 0, %s49
      %s51 = sphi 0, %s49
      %s52 = sphi 0, %s51
      %s66 = sphi 0, %s52
      %s70 = sphi 0, %s70
      %s72 = sphi 0, %s70
      %s73 = sphi 0, %s72
      %s87 = sphi 0, %s73
      %s91 = sphi 0, %s91
      %s93 = sphi 0, %s91
      %s94 = sphi 0, %s93
      %s108 = sphi 0, %s94
      %s112 = sphi 0, %s112
      %s114 = sphi 0, %s112
      %s115 = sphi 0, %s114
      %s129 = sphi 0, %s115
      %s135 = sphi 0, %s137
      %s138 = sphi 0, %s135
      %s139 = sphi 0, %s138
      %s155 = sphi 0, %s139
      %s161 = sphi 0, %s163
      %s164 = sphi 0, %s161
      %s165 = sphi 0, %s164
      %s181 = sphi 0, %s165
    $region4: #{encoder_layer.1} parent=1 // loop_header_branch
      %18 = sbr.rel (%p16) target = $region8
    $region5: #{encoder_layer.1} parent=1 // loop_body
      %s20 = ssub.s32 %s15, 1
      %s21 = ssub.s32 %s15, 2
      %s22 = sadd.s32 %s15, 1
      %s23 = ssub.s32 %s15, %s22
      %p24 = scmp.eq.s32.totalorder %s23, 0
      %s26 = sadd.s32 %s25, 1
      %s27 = scalar_select %p24, %s25, %s26
      %p30 = pneg %p24
      %p31 = scmp.eq.s32.totalorder %s15, 1
      %p32 = por %p30, %p31
      %p33 = scmp.ne.s32.totalorder %s25, %s28
      %p34 = scmp.eq.s32.totalorder %s15, 0
      %p35 = por %p33, %p34
      %p36 = scmp.ne.s32.totalorder %s25, %s28
      %p37 = scmp.eq.s32.totalorder %s20, 1
      %p38 = por %p36, %p37
      %p39 = scmp.ne.s32.totalorder %s28, %s29
      %p40 = scmp.eq.s32.totalorder %s20, 0
      %p41 = por %p39, %p40
      %p42 = scmp.ne.s32.totalorder %s28, %s29
      %p43 = scmp.eq.s32.totalorder %s21, 1
      %p44 = por %p42, %p43
      %p46 = scmp.ne.s32.totalorder %s29, %s45
      %p47 = scmp.eq.s32.totalorder %s21, 0
      %p48 = por %p46, %p47
      %s50 = sadd.s32 %s49, 1
      %p53 = scmp.eq.s32.totalorder %s15, 1
      %p54 = scmp.ne.s32.totalorder %s49, %s51
      %p55 = scmp.eq.s32.totalorder %s15, 0
      %p56 = por %p54, %p55
      %p57 = scmp.ne.s32.totalorder %s49, %s51
      %p58 = scmp.eq.s32.totalorder %s20, 1
      %p59 = por %p57, %p58
      %p60 = scmp.ne.s32.totalorder %s51, %s52
      %p61 = scmp.eq.s32.totalorder %s20, 0
      %p62 = por %p60, %p61
      %p63 = scmp.ne.s32.totalorder %s51, %s52
      %p64 = scmp.eq.s32.totalorder %s21, 1
      %p65 = por %p63, %p64
      %p67 = scmp.ne.s32.totalorder %s52, %s66
      %p68 = scmp.eq.s32.totalorder %s21, 0
      %p69 = por %p67, %p68
      %s71 = sadd.s32 %s70, 1
      %p74 = scmp.eq.s32.totalorder %s15, 1
      %p75 = scmp.ne.s32.totalorder %s70, %s72
      %p76 = scmp.eq.s32.totalorder %s15, 0
      %p77 = por %p75, %p76
      %p78 = scmp.ne.s32.totalorder %s70, %s72
      %p79 = scmp.eq.s32.totalorder %s20, 1
      %p80 = por %p78, %p79
      %p81 = scmp.ne.s32.totalorder %s72, %s73
      %p82 = scmp.eq.s32.totalorder %s20, 0
      %p83 = por %p81, %p82
      %p84 = scmp.ne.s32.totalorder %s72, %s73
      %p85 = scmp.eq.s32.totalorder %s21, 1
      %p86 = por %p84, %p85
      %p88 = scmp.ne.s32.totalorder %s73, %s87
      %p89 = scmp.eq.s32.totalorder %s21, 0
      %p90 = por %p88, %p89
      %s92 = sadd.s32 %s91, 1
      %p95 = scmp.eq.s32.totalorder %s15, 1
      %p96 = scmp.ne.s32.totalorder %s91, %s93
      %p97 = scmp.eq.s32.totalorder %s15, 0
      %p98 = por %p96, %p97
      %p99 = scmp.ne.s32.totalorder %s91, %s93
      %p100 = scmp.eq.s32.totalorder %s20, 1
      %p101 = por %p99, %p100
      %p102 = scmp.ne.s32.totalorder %s93, %s94
      %p103 = scmp.eq.s32.totalorder %s20, 0
      %p104 = por %p102, %p103
      %p105 = scmp.ne.s32.totalorder %s93, %s94
      %p106 = scmp.eq.s32.totalorder %s21, 1
      %p107 = por %p105, %p106
      %p109 = scmp.ne.s32.totalorder %s94, %s108
      %p110 = scmp.eq.s32.totalorder %s21, 0
      %p111 = por %p109, %p110
      %s113 = sadd.s32 %s112, 1
      %p116 = scmp.eq.s32.totalorder %s15, 1
      %p117 = scmp.ne.s32.totalorder %s112, %s114
      %p118 = scmp.eq.s32.totalorder %s15, 0
      %p119 = por %p117, %p118
      %p120 = scmp.ne.s32.totalorder %s112, %s114
      %p121 = scmp.eq.s32.totalorder %s20, 1
      %p122 = por %p120, %p121
      %p123 = scmp.ne.s32.totalorder %s114, %s115
      %p124 = scmp.eq.s32.totalorder %s20, 0
      %p125 = por %p123, %p124
      %p126 = scmp.ne.s32.totalorder %s114, %s115
      %p127 = scmp.eq.s32.totalorder %s21, 1
      %p128 = por %p126, %p127
      %p130 = scmp.ne.s32.totalorder %s115, %s129
      %p131 = scmp.eq.s32.totalorder %s21, 0
      %p132 = por %p130, %p131
      %s133 = ssub.s32 %s15, %s22
      %p134 = scmp.eq.s32.totalorder %s133, 0
      %s136 = sadd.s32 %s135, 1
      %s137 = scalar_select %p134, %s135, %s136
      %p140 = pneg %p134
      %p141 = scmp.eq.s32.totalorder %s15, 1
      %p142 = por %p140, %p141
      %p143 = scmp.ne.s32.totalorder %s135, %s138
      %p144 = scmp.eq.s32.totalorder %s15, 0
      %p145 = por %p143, %p144
      %p146 = scmp.ne.s32.totalorder %s135, %s138
      %p147 = scmp.eq.s32.totalorder %s20, 1
      %p148 = por %p146, %p147
      %p149 = scmp.ne.s32.totalorder %s138, %s139
      %p150 = scmp.eq.s32.totalorder %s20, 0
      %p151 = por %p149, %p150
      %p152 = scmp.ne.s32.totalorder %s138, %s139
      %p153 = scmp.eq.s32.totalorder %s21, 1
      %p154 = por %p152, %p153
      %p156 = scmp.ne.s32.totalorder %s139, %s155
      %p157 = scmp.eq.s32.totalorder %s21, 0
      %p158 = por %p156, %p157
      %s159 = ssub.s32 %s15, %s22
      %p160 = scmp.eq.s32.totalorder %s159, 0
      %s162 = sadd.s32 %s161, 1
      %s163 = scalar_select %p160, %s161, %s162
      %p166 = pneg %p160
      %p167 = scmp.eq.s32.totalorder %s15, 1
      %p168 = por %p166, %p167
      %p169 = scmp.ne.s32.totalorder %s161, %s164
      %p170 = scmp.eq.s32.totalorder %s15, 0
      %p171 = por %p169, %p170
      %p172 = scmp.ne.s32.totalorder %s161, %s164
      %p173 = scmp.eq.s32.totalorder %s20, 1
      %p174 = por %p172, %p173
      %p175 = scmp.ne.s32.totalorder %s164, %s165
      %p176 = scmp.eq.s32.totalorder %s20, 0
      %p177 = por %p175, %p176
      %p178 = scmp.ne.s32.totalorder %s164, %s165
      %p179 = scmp.eq.s32.totalorder %s21, 1
      %p180 = por %p178, %p179
      %p182 = scmp.ne.s32.totalorder %s165, %s181
      %p183 = scmp.eq.s32.totalorder %s21, 0
      %p184 = por %p182, %p183
      %p185 = scmp.le.s32.totalorder 1, %s15
      %p186 = scmp.lt.s32.totalorder %s15, 3
      %p187 = pnand %p185, %p186
      %p188 = pneg %p187
      // Predicated region
      $region9: #{encoder_layer.1} parent=5 // pred_check
        _
      $region10: #{encoder_layer.1} parent=5 // pred_check_branch
        %190 = sbr.rel (%p187) target = $region12
      $region11: #{encoder_layer.1} parent=5 // pred_region
        %s191 = ssub.s32 %s15, 1
        // Predicated region
        $region13: #{encoder_layer.1} parent=11 // pred_check
          %p192 = pneg %p62
        $region14: #{encoder_layer.1} parent=11 // pred_check_branch
          %194 = sbr.rel (%p192) target = $region16
        $region15: #{encoder_layer.1} parent=11 // pred_region
          _
        $region16: #{encoder_layer.1} parent=11 // pred_fallthru
          _
        // Predicated region
        $region17: #{encoder_layer.1} parent=11 // pred_check
          %p195 = pneg %p83
        $region18: #{encoder_layer.1} parent=11 // pred_check_branch
          %197 = sbr.rel (%p195) target = $region20
        $region19: #{encoder_layer.1} parent=11 // pred_region
          _
        $region20: #{encoder_layer.1} parent=11 // pred_fallthru
          _
        // Predicated region
        $region21: #{encoder_layer.1} parent=11 // pred_check
          %p198 = pneg %p104
        $region22: #{encoder_layer.1} parent=11 // pred_check_branch
          %200 = sbr.rel (%p198) target = $region24
        $region23: #{encoder_layer.1} parent=11 // pred_region
          _
        $region24: #{encoder_layer.1} parent=11 // pred_fallthru
          _
        // Predicated region
        $region25: #{encoder_layer.1} parent=11 // pred_check
          %p201 = pneg %p125
        $region26: #{encoder_layer.1} parent=11 // pred_check_branch
          %203 = sbr.rel (%p201) target = $region28
        $region27: #{encoder_layer.1} parent=11 // pred_region
          _
        $region28: #{encoder_layer.1} parent=11 // pred_fallthru
          _
      $region12: #{encoder_layer.1} parent=5 // pred_fallthru
        _
      %p204 = scmp.lt.s32.totalorder %s15, 2
      // Predicated region
      $region29: #{encoder_layer.1} parent=5 // pred_check
        %p205 = pneg %p204
      $region30: #{encoder_layer.1} parent=5 // pred_check_branch
        %207 = sbr.rel (%p205) target = $region32
      $region31: #{encoder_layer.1} parent=5 // pred_region
        // Predicated region
        $region33: #{encoder_layer.1} parent=31 // pred_check
          %p208 = pneg %p35
        $region34: #{encoder_layer.1} parent=31 // pred_check_branch
          %210 = sbr.rel (%p208) target = $region36
        $region35: #{encoder_layer.1} parent=31 // pred_region
          %p211 = scmp.lt.s32.totalorder %s15, 1
          %s212 = scalar_select %p211, %s15, 1
          %s213 = smul.addr %s212, 8
          %s214 = scalar_lea.vmem %s0, %s213
        $region36: #{encoder_layer.1} parent=31 // pred_fallthru
          _
        // Predicated region
        $region37: #{encoder_layer.1} parent=31 // pred_check
          %p215 = pneg %p145
        $region38: #{encoder_layer.1} parent=31 // pred_check_branch
          %217 = sbr.rel (%p215) target = $region40
        $region39: #{encoder_layer.1} parent=31 // pred_region
          %p218 = scmp.lt.s32.totalorder %s15, 1
          %s219 = scalar_select %p218, %s15, 1
          %s220 = smul.addr %s219, 2
          %s221 = scalar_lea.vmem %s5, %s220
        $region40: #{encoder_layer.1} parent=31 // pred_fallthru
          _
      $region32: #{encoder_layer.1} parent=5 // pred_fallthru
        _
      %p222 = scmp.le.s32.totalorder 1, %s15
      %p223 = scmp.lt.s32.totalorder %s15, 3
      %p224 = pnand %p222, %p223
      %p225 = pneg %p224
      // Predicated region
      $region41: #{encoder_layer.1} parent=5 // pred_check
        _
      $region42: #{encoder_layer.1} parent=5 // pred_check_branch
        %227 = sbr.rel (%p224) target = $region44
      $region43: #{encoder_layer.1} parent=5 // pred_region
        %s228 = ssub.s32 %s15, 1
        %p229 = scmp.lt.s32.totalorder %s20, 1
        %s230 = scalar_select %p229, %s20, 1
        %s231 = smul.addr %s230, 8
        %s232 = scalar_lea.vmem %s0, %s231
        %p233 = pneg %p41
        %p234 = pneg %p38
        %p235 = pneg %p62
        %p236 = pneg %p59
        %p237 = pneg %p83
        %p238 = pneg %p80
        %p239 = pneg %p104
        %p240 = pneg %p101
        %p241 = pneg %p125
        %p242 = pneg %p122
        %p243 = scmp.lt.s32.totalorder %s20, 1
        %s244 = scalar_select %p243, %s20, 1
        %s245 = smul.addr %s244, 2
        %s246 = scalar_lea.vmem %s5, %s245
        %p247 = pneg %p151
        %p248 = pneg %p148
        %p249 = pneg %p177
        %p250 = pneg %p174
        %s251 = sand.u32 %s164, 1
        %s252 = scalar_lea.sflag [#allocation3], %s251
        %s253 = sand.u32 %s164, 1
        %s254 = smul.addr %s253, 8
        %s255 = scalar_lea.vmem [#allocation2], %s254
        %p256 = scmp.lt.s32.totalorder %s20, 1
        %s257 = scalar_select %p256, %s20, 1
        %s258 = smul.addr %s257, 8
        %s259 = scalar_lea.vmem %s0, %s258
        %p260 = scmp.lt.s32.totalorder %s20, 1
        %s261 = scalar_select %p260, %s20, 1
        %s262 = smul.addr %s261, 2
        %s263 = scalar_lea.vmem %s5, %s262
        %v264 = vld [vmem:[%s259] sm:$0xff]
        %v265 = vld [vmem:[%s4] sm:$0x1f]
        %v266 = vld [vmem:[%s4 + $0x8] sm:$0x1f]
        %v267 = vld [vmem:[%s263] sm:$0x3]
        %v268 = vld [vmem:[%s1] sm:$0xff]
        %v269 = vld [vmem:[%s1 + $0x8] sm:$0xff]
        %v270 = vld [vmem:[%s1 + $0x10] sm:$0xff]
        %v271 = vld [vmem:[%s1 + $0x18] sm:$0xff]
        %v272 = vld [vmem:[%s1 + $0x20] sm:$0xff]
        %v273 = vld [vmem:[%s1 + $0x28] sm:$0xff]
        %v274 = vld [vmem:[%s1 + $0x30] sm:$0xff]
        %v275 = vld [vmem:[%s1 + $0x38] sm:$0xff]
        %vm276 = vcmask 261120
        %v278 = vsel %vm276, %v264, 0
        %280 = vmatpush.msra.mxu0 0.0
        %281 = vmatpush.msra.mxu0 0.0
        %282 = vmatpush.msra.mxu0 0.0
        %283 = vmatpush.msra.mxu0 0.0
        %284 = vmatpush.msra.mxu0 0.0
        %285 = vmatpush.msra.mxu0 0.0
        %286 = vmatpush.msra.mxu0 0.0
        %287 = vmatpush.msra.mxu0 0.0
        %288 = vmatpush.msra.mxu0 0.0
        %289 = vmatpush.msra.mxu0 0.0
        %290 = vmatpush.msra.mxu0 0.0
        %291 = vmatpush.msra.mxu0 0.0
        %292 = vmatpush.msra.mxu0 %v274
        %293 = vmatpush.msra.mxu0 %v272
        %294 = vmatpush.msra.mxu0 %v270
        %295 = vmatpush.msra.mxu0 %v268
        %296 = vmatmul.f32.gmra.mxu0 %v278
        %v297 = vpop.f32.mrf.mxu0
        %v298 = vadd.f32 0.0, %v297
        %299 = vdwg.mxu0
        %300 = vmatpush.msra.mxu0 0.0
        %301 = vmatpush.msra.mxu0 0.0
        %302 = vmatpush.msra.mxu0 0.0
        %303 = vmatpush.msra.mxu0 0.0
        %304 = vmatpush.msra.mxu0 0.0
        %305 = vmatpush.msra.mxu0 0.0
        %306 = vmatpush.msra.mxu0 0.0
        %307 = vmatpush.msra.mxu0 0.0
        %308 = vmatpush.msra.mxu0 0.0
        %309 = vmatpush.msra.mxu0 0.0
        %310 = vmatpush.msra.mxu0 0.0
        %311 = vmatpush.msra.mxu0 0.0
        %312 = vmatpush.msra.mxu0 %v275
        %313 = vmatpush.msra.mxu0 %v273
        %314 = vmatpush.msra.mxu0 %v271
        %315 = vmatpush.msra.mxu0 %v269
        %316 = vmatmul.f32.gmra.mxu0 %v278
        %v317 = vpop.f32.mrf.mxu0
        %v318 = vadd.f32 0.0, %v317
        %319 = vdwg.mxu0
        %321 = vrot.lane.b32.xlu0 %v298, 96
        %v322 = vpop.permute.xlu0 %321
        %vm323 = vcmask 64512
        %v324 = vsel %vm323, %v298, 0
        %v326 = vsel %vm323, %v322, 0
        %328 = vmatpush.xpose.msra.mxu0 0.0
        %329 = vmatpush.xpose.msra.mxu0 0.0
        %330 = vmatpush.xpose.msra.mxu0 0.0
        %331 = vmatpush.xpose.msra.mxu0 0.0
        %332 = vmatpush.xpose.msra.mxu0 0.0
        %333 = vmatpush.xpose.msra.mxu0 0.0
        %334 = vmatpush.xpose.msra.mxu0 0.0
        %335 = vmatpush.xpose.msra.mxu0 0.0
        %336 = vmatpush.xpose.msra.mxu0 0.0
        %337 = vmatpush.xpose.msra.mxu0 0.0
        %338 = vmatpush.xpose.msra.mxu0 0.0
        %339 = vmatpush.xpose.msra.mxu0 0.0
        %340 = vmatpush.xpose.msra.mxu0 0.0
        %341 = vmatpush.xpose.msra.mxu0 0.0
        %342 = vmatpush.xpose.msra.mxu0 0.0
        %343 = vmatpush.xpose.msra.mxu0 %v326
        %344 = vmatmul.f32.gmra.mxu0 %v324
        %v345 = vpop.f32.mrf.mxu0
        %v346 = vadd.f32 0.0, %v345
        %347 = vdwg.mxu0
        %348 = vrot.lane.b32.xlu0 %v298, 120
        %v349 = vpop.permute.xlu0 %348
        %350 = vrot.lane.b32.xlu0 %v298, 88
        %v351 = vpop.permute.xlu0 %350
        %v352 = vsel %vm323, %v349, 0
        %v354 = vsel %vm323, %v351, 0
        %356 = vmatpush.xpose.msra.mxu0 0.0
        %357 = vmatpush.xpose.msra.mxu0 0.0
        %358 = vmatpush.xpose.msra.mxu0 0.0
        %359 = vmatpush.xpose.msra.mxu0 0.0
        %360 = vmatpush.xpose.msra.mxu0 0.0
        %361 = vmatpush.xpose.msra.mxu0 0.0
        %362 = vmatpush.xpose.msra.mxu0 0.0
        %363 = vmatpush.xpose.msra.mxu0 0.0
        %364 = vmatpush.xpose.msra.mxu0 0.0
        %365 = vmatpush.xpose.msra.mxu0 0.0
        %366 = vmatpush.xpose.msra.mxu0 0.0
        %367 = vmatpush.xpose.msra.mxu0 0.0
        %368 = vmatpush.xpose.msra.mxu0 0.0
        %369 = vmatpush.xpose.msra.mxu0 0.0
        %370 = vmatpush.xpose.msra.mxu0 0.0
        %371 = vmatpush.xpose.msra.mxu0 %v354
        %372 = vmatmul.f32.gmra.mxu0 %v352
        %v373 = vpop.f32.mrf.mxu0
        %v374 = vadd.f32 0.0, %v373
        %375 = vdwg.mxu0
        %376 = vrot.lane.b32.xlu0 %v298, 112
        %v377 = vpop.permute.xlu0 %376
        %378 = vrot.lane.b32.xlu0 %v298, 80
        %v379 = vpop.permute.xlu0 %378
        %v380 = vsel %vm323, %v377, 0
        %v382 = vsel %vm323, %v379, 0
        %384 = vmatpush.xpose.msra.mxu0 0.0
        %385 = vmatpush.xpose.msra.mxu0 0.0
        %386 = vmatpush.xpose.msra.mxu0 0.0
        %387 = vmatpush.xpose.msra.mxu0 0.0
        %388 = vmatpush.xpose.msra.mxu0 0.0
        %389 = vmatpush.xpose.msra.mxu0 0.0
        %390 = vmatpush.xpose.msra.mxu0 0.0
        %391 = vmatpush.xpose.msra.mxu0 0.0
        %392 = vmatpush.xpose.msra.mxu0 0.0
        %393 = vmatpush.xpose.msra.mxu0 0.0
        %394 = vmatpush.xpose.msra.mxu0 0.0
        %395 = vmatpush.xpose.msra.mxu0 0.0
        %396 = vmatpush.xpose.msra.mxu0 0.0
        %397 = vmatpush.xpose.msra.mxu0 0.0
        %398 = vmatpush.xpose.msra.mxu0 0.0
        %399 = vmatpush.xpose.msra.mxu0 %v382
        %400 = vmatmul.f32.gmra.mxu0 %v380
        %v401 = vpop.f32.mrf.mxu0
        %v402 = vadd.f32 0.0, %v401
        %403 = vdwg.mxu0
        %404 = vrot.lane.b32.xlu0 %v298, 104
        %v405 = vpop.permute.xlu0 %404
        %406 = vrot.lane.b32.xlu0 %v298, 72
        %v407 = vpop.permute.xlu0 %406
        %v408 = vsel %vm323, %v405, 0
        %v410 = vsel %vm323, %v407, 0
        %412 = vmatpush.xpose.msra.mxu0 0.0
        %413 = vmatpush.xpose.msra.mxu0 0.0
        %414 = vmatpush.xpose.msra.mxu0 0.0
        %415 = vmatpush.xpose.msra.mxu0 0.0
        %416 = vmatpush.xpose.msra.mxu0 0.0
        %417 = vmatpush.xpose.msra.mxu0 0.0
        %418 = vmatpush.xpose.msra.mxu0 0.0
        %419 = vmatpush.xpose.msra.mxu0 0.0
        %420 = vmatpush.xpose.msra.mxu0 0.0
        %421 = vmatpush.xpose.msra.mxu0 0.0
        %422 = vmatpush.xpose.msra.mxu0 0.0
        %423 = vmatpush.xpose.msra.mxu0 0.0
        %424 = vmatpush.xpose.msra.mxu0 0.0
        %425 = vmatpush.xpose.msra.mxu0 0.0
        %426 = vmatpush.xpose.msra.mxu0 0.0
        %427 = vmatpush.xpose.msra.mxu0 %v410
        %428 = vmatmul.f32.gmra.mxu0 %v408
        %v429 = vpop.f32.mrf.mxu0
        %v430 = vadd.f32 0.0, %v429
        %431 = vdwg.mxu0
        %v432 = vsel %vm323, %v346, -inf
        %433 = vmax.xlane.f32.xlu0 %v432
        %v434 = vpop.xlane.xlu0 %433
        %v435 = vsel %vm323, %v374, -inf
        %436 = vmax.xlane.f32.xlu0 %v435
        %v437 = vpop.xlane.xlu0 %436
        %v438 = vsel %vm323, %v402, -inf
        %439 = vmax.xlane.f32.xlu0 %v438
        %v440 = vpop.xlane.xlu0 %439
        %v441 = vsel %vm323, %v430, -inf
        %442 = vmax.xlane.f32.xlu0 %v441
        %v443 = vpop.xlane.xlu0 %442
        %v444 = vsub.f32 %v346, %v434
        %v445 = vsub.f32 %v374, %v437
        %v446 = vsub.f32 %v402, %v440
        %v447 = vsub.f32 %v430, %v443
        %v448 = vmul.f32 %v444, 1.442695
        %v449 = vpow.pop %v448
        %v450 = vmul.f32 %v445, 1.442695
        %v451 = vpow.pop %v450
        %v452 = vmul.f32 %v446, 1.442695
        %v453 = vpow.pop %v452
        %v454 = vmul.f32 %v447, 1.442695
        %v455 = vpow.pop %v454
        %v456 = vsel %vm323, %v449, 0.0
        %457 = vadd.xlane.f32.xlu0 %v456
        %v458 = vpop.xlane.xlu0 %457
        %v459 = vsel %vm323, %v451, 0.0
        %460 = vadd.xlane.f32.xlu0 %v459
        %v461 = vpop.xlane.xlu0 %460
        %v462 = vsel %vm323, %v453, 0.0
        %463 = vadd.xlane.f32.xlu0 %v462
        %v464 = vpop.xlane.xlu0 %463
        %v465 = vsel %vm323, %v455, 0.0
        %466 = vadd.xlane.f32.xlu0 %v465
        %v467 = vpop.xlane.xlu0 %466
        %v468 = vrcp.pop %v458
        %v469 = vmul.f32 %v458, %v468
        %v470 = vsub.f32 1.0, %v469
        %v471 = vmul.f32 %v468, %v470
        %v472 = vadd.f32 %v468, %v471
        %vm473 = vweird.f32 %v458
        %vm474 = vweird.f32 %v468
        %vm475 = vmor %vm473, %vm474
        %v476 = vsel %vm475, %v468, %v472
        %v477 = vand.u32 2147483647, %v458
        %vm478 = vcmp.eq.f32.partialorder %v477, 8.507059e+37
        %v479 = vand.u32 %v458, 2147483648
        %v480 = vor.u32 1.1754944e-38, %v479
        %v481 = vsel %vm478, %v480, %v476
        %v482 = vrcp.pop %v461
        %v483 = vmul.f32 %v461, %v482
        %v484 = vsub.f32 1.0, %v483
        %v485 = vmul.f32 %v482, %v484
        %v486 = vadd.f32 %v482, %v485
        %vm487 = vweird.f32 %v461
        %vm488 = vweird.f32 %v482
        %vm489 = vmor %vm487, %vm488
        %v490 = vsel %vm489, %v482, %v486
        %v491 = vand.u32 2147483647, %v461
        %vm492 = vcmp.eq.f32.partialorder %v491, 8.507059e+37
        %v493 = vand.u32 %v461, 2147483648
        %v494 = vor.u32 1.1754944e-38, %v493
        %v495 = vsel %vm492, %v494, %v490
        %v496 = vrcp.pop %v464
        %v497 = vmul.f32 %v464, %v496
        %v498 = vsub.f32 1.0, %v497
        %v499 = vmul.f32 %v496, %v498
        %v500 = vadd.f32 %v496, %v499
        %vm501 = vweird.f32 %v464
        %vm502 = vweird.f32 %v496
        %vm503 = vmor %vm501, %vm502
        %v504 = vsel %vm503, %v496, %v500
        %v505 = vand.u32 2147483647, %v464
        %vm506 = vcmp.eq.f32.partialorder %v505, 8.507059e+37
        %v507 = vand.u32 %v464, 2147483648
        %v508 = vor.u32 1.1754944e-38, %v507
        %v509 = vsel %vm506, %v508, %v504
        %v510 = vrcp.pop %v467
        %v511 = vmul.f32 %v467, %v510
        %v512 = vsub.f32 1.0, %v511
        %v513 = vmul.f32 %v510, %v512
        %v514 = vadd.f32 %v510, %v513
        %vm515 = vweird.f32 %v467
        %vm516 = vweird.f32 %v510
        %vm517 = vmor %vm515, %vm516
        %v518 = vsel %vm517, %v510, %v514
        %v519 = vand.u32 2147483647, %v467
        %vm520 = vcmp.eq.f32.partialorder %v519, 8.507059e+37
        %v521 = vand.u32 %v467, 2147483648
        %v522 = vor.u32 1.1754944e-38, %v521
        %v523 = vsel %vm520, %v522, %v518
        %v524 = vmul.f32 %v449, %v481
        %v525 = vmul.f32 %v451, %v495
        %v526 = vmul.f32 %v453, %v509
        %v527 = vmul.f32 %v455, %v523
        %528 = vrot.lane.b32.xlu0 %v298, 32
        %v529 = vpop.permute.xlu0 %528
        %v532 = vsel %vm323, %v525, 0
        %534 = vmatpush.msra.mxu0 0.0
        %535 = vmatpush.msra.mxu0 0.0
        %536 = vmatpush.msra.mxu0 0.0
        %537 = vmatpush.msra.mxu0 0.0
        %538 = vmatpush.msra.mxu0 0.0
        %539 = vmatpush.msra.mxu0 0.0
        %540 = vmatpush.msra.mxu0 0.0
        %541 = vmatpush.msra.mxu0 0.0
        %542 = vmatpush.msra.mxu0 0.0
        %543 = vmatpush.msra.mxu0 0.0
        %544 = vmatpush.msra.mxu0 0.0
        %545 = vmatpush.msra.mxu0 0.0
        %546 = vmatpush.msra.mxu0 0.0
        %547 = vmatpush.msra.mxu0 0.0
        %548 = vmatpush.msra.mxu0 0.0
        %549 = vmatpush.msra.mxu0 %v529
        %550 = vmatmul.f32.gmra.mxu0 %v532
        %v551 = vpop.f32.mrf.mxu0
        %v552 = vadd.f32 0.0, %v551
        %553 = vdwg.mxu0
        %554 = vrot.lane.b32.xlu0 %v298, 64
        %v555 = vpop.permute.xlu0 %554
        %v558 = vsel %vm323, %v524, 0
        %560 = vmatpush.msra.mxu0 0.0
        %561 = vmatpush.msra.mxu0 0.0
        %562 = vmatpush.msra.mxu0 0.0
        %563 = vmatpush.msra.mxu0 0.0
        %564 = vmatpush.msra.mxu0 0.0
        %565 = vmatpush.msra.mxu0 0.0
        %566 = vmatpush.msra.mxu0 0.0
        %567 = vmatpush.msra.mxu0 0.0
        %568 = vmatpush.msra.mxu0 0.0
        %569 = vmatpush.msra.mxu0 0.0
        %570 = vmatpush.msra.mxu0 0.0
        %571 = vmatpush.msra.mxu0 0.0
        %572 = vmatpush.msra.mxu0 0.0
        %573 = vmatpush.msra.mxu0 0.0
        %574 = vmatpush.msra.mxu0 0.0
        %575 = vmatpush.msra.mxu0 %v555
        %576 = vmatmul.f32.gmra.mxu0 %v558
        %v577 = vpop.f32.mrf.mxu0
        %v578 = vadd.f32 %v552, %v577
        %579 = vdwg.mxu0
        %v581 = vsel %vm323, %v526, 0
        %583 = vmatpush.msra.mxu0 0.0
        %584 = vmatpush.msra.mxu0 0.0
        %585 = vmatpush.msra.mxu0 0.0
        %586 = vmatpush.msra.mxu0 0.0
        %587 = vmatpush.msra.mxu0 0.0
        %588 = vmatpush.msra.mxu0 0.0
        %589 = vmatpush.msra.mxu0 0.0
        %590 = vmatpush.msra.mxu0 0.0
        %591 = vmatpush.msra.mxu0 0.0
        %592 = vmatpush.msra.mxu0 0.0
        %593 = vmatpush.msra.mxu0 0.0
        %594 = vmatpush.msra.mxu0 0.0
        %595 = vmatpush.msra.mxu0 0.0
        %596 = vmatpush.msra.mxu0 0.0
        %597 = vmatpush.msra.mxu0 0.0
        %598 = vmatpush.msra.mxu0 %v318
        %599 = vmatmul.f32.gmra.mxu0 %v581
        %v600 = vpop.f32.mrf.mxu0
        %v601 = vadd.f32 0.0, %v600
        %602 = vdwg.mxu0
        %v603 = vadd.f32 %v578, %v601
        %605 = vrot.lane.b32.xlu0 %v318, 96
        %v606 = vpop.permute.xlu0 %605
        %v609 = vsel %vm323, %v527, 0
        %611 = vmatpush.msra.mxu0 0.0
        %612 = vmatpush.msra.mxu0 0.0
        %613 = vmatpush.msra.mxu0 0.0
        %614 = vmatpush.msra.mxu0 0.0
        %615 = vmatpush.msra.mxu0 0.0
        %616 = vmatpush.msra.mxu0 0.0
        %617 = vmatpush.msra.mxu0 0.0
        %618 = vmatpush.msra.mxu0 0.0
        %619 = vmatpush.msra.mxu0 0.0
        %620 = vmatpush.msra.mxu0 0.0
        %621 = vmatpush.msra.mxu0 0.0
        %622 = vmatpush.msra.mxu0 0.0
        %623 = vmatpush.msra.mxu0 0.0
        %624 = vmatpush.msra.mxu0 0.0
        %625 = vmatpush.msra.mxu0 0.0
        %626 = vmatpush.msra.mxu0 %v606
        %627 = vmatmul.f32.gmra.mxu0 %v609
        %v628 = vpop.f32.mrf.mxu0
        %v629 = vadd.f32 0.0, %v628
        %630 = vdwg.mxu0
        %v631 = vadd.f32 %v603, %v629
        %v632 = vadd.f32 %v264, %v631
        %v633 = vsel %vm276, %v632, 0.0
        %v634 = vrot.slane %v633, 4
        %v635 = vadd.f32 %v633, %v634
        %v636 = vrot.slane %v635, 2
        %v637 = vadd.f32 %v635, %v636
        %v638 = vrot.slane %v637, 1
        %v639 = vadd.f32 %v637, %v638
        %v640 = vrcp.pop 8.0
        %v641 = vmul.f32 8.0, %v640
        %v642 = vsub.f32 1.0, %v641
        %v643 = vmul.f32 %v640, %v642
        %v644 = vadd.f32 %v640, %v643
        %vm645 = vweird.f32 %v640
        %v646 = vsel %vm645, %v640, %v644
        %v647 = vmul.f32 %v639, %v646
        %v648 = vmul.f32 %v632, %v632
        %v649 = vsel %vm276, %v648, 0.0
        %v650 = vrot.slane %v649, 4
        %v651 = vadd.f32 %v649, %v650
        %v652 = vrot.slane %v651, 2
        %v653 = vadd.f32 %v651, %v652
        %v654 = vrot.slane %v653, 1
        %v655 = vadd.f32 %v653, %v654
        %v656 = vmul.f32 %v655, %v646
        %v657 = vmul.f32 %v647, %v647
        %v658 = vsub.f32 %v656, %v657
        %v659 = vadd.f32 %v658, 1e-05
        %v660 = vrsqrt.pop %v659
        %v661 = vmul.f32 %v660, %v659
        %v662 = vmul.f32 %v661, %v660
        %v663 = vmul.f32 0.5, %v662
        %v664 = vsub.f32 1.5, %v663
        %v665 = vmul.f32 %v660, %v664
        %vm666 = vweird.f32 %v659
        %vm667 = vweird.f32 %v660
        %vm668 = vmor %vm666, %vm667
        %v669 = vsel %vm668, %v660, %v665
        %v670 = vmul.f32 %v669, %v265
        %v671 = vmul.f32 %v647, %v670
        %v673 = vrot.slane %v671, 7
        %v675 = vsub.f32 %v265, %v673
        %v676 = vperm.slane %v670, 1
        %v677 = vmul.f32 %v632, %v676
        %v678 = vperm.slane %v675, 2
        %v679 = vadd.f32 %v677, %v678
        %v680 = vld [vmem:[%s2] sm:$0xff]
        %v681 = vld [vmem:[%s2 + $0x8] sm:$0xff]
        %v682 = vld [vmem:[%s2 + $0x10] sm:$0xff]
        %v683 = vld [vmem:[%s2 + $0x18] sm:$0xff]
        %v684 = vld [vmem:[%s2 + $0x20] sm:$0xff]
        %v685 = vld [vmem:[%s2 + $0x28] sm:$0xff]
        %v686 = vld [vmem:[%s2 + $0x30] sm:$0xff]
        %v687 = vld [vmem:[%s2 + $0x38] sm:$0xff]
        %v688 = vperm.slane %v265, 0
        %v689 = vperm.slane %v266, 0
        %v691 = vsel %vm276, %v679, 0
        %693 = vmatpush.msra.mxu0 0.0
        %694 = vmatpush.msra.mxu0 0.0
        %695 = vmatpush.msra.mxu0 0.0
        %696 = vmatpush.msra.mxu0 0.0
        %697 = vmatpush.msra.mxu0 0.0
        %698 = vmatpush.msra.mxu0 0.0
        %699 = vmatpush.msra.mxu0 0.0
        %700 = vmatpush.msra.mxu0 0.0
        %701 = vmatpush.msra.mxu0 0.0
        %702 = vmatpush.msra.mxu0 0.0
        %703 = vmatpush.msra.mxu0 0.0
        %704 = vmatpush.msra.mxu0 0.0
        %705 = vmatpush.msra.mxu0 %v686
        %706 = vmatpush.msra.mxu0 %v684
        %707 = vmatpush.msra.mxu0 %v682
        %708 = vmatpush.msra.mxu0 %v680
        %709 = vmatmul.f32.gmra.mxu0 %v691
        %v710 = vpop.f32.mrf.mxu0
        %v711 = vadd.f32 %v688, %v710
        %712 = vdwg.mxu0
        %713 = vmatpush.msra.mxu0 0.0
        %714 = vmatpush.msra.mxu0 0.0
        %715 = vmatpush.msra.mxu0 0.0
        %716 = vmatpush.msra.mxu0 0.0
        %717 = vmatpush.msra.mxu0 0.0
        %718 = vmatpush.msra.mxu0 0.0
        %719 = vmatpush.msra.mxu0 0.0
        %720 = vmatpush.msra.mxu0 0.0
        %721 = vmatpush.msra.mxu0 0.0
        %722 = vmatpush.msra.mxu0 0.0
        %723 = vmatpush.msra.mxu0 0.0
        %724 = vmatpush.msra.mxu0 0.0
        %725 = vmatpush.msra.mxu0 %v687
        %726 = vmatpush.msra.mxu0 %v685
        %727 = vmatpush.msra.mxu0 %v683
        %728 = vmatpush.msra.mxu0 %v681
        %729 = vmatmul.f32.gmra.mxu0 %v691
        %v730 = vpop.f32.mrf.mxu0
        %v731 = vadd.f32 %v689, %v730
        %732 = vdwg.mxu0
        %v733 = vmax.f32 %v711, 0.0
        %v734 = vmax.f32 %v731, 0.0
        %v736 = vperm.slane %v267, 0
        %v737 = vperm.slane %v267, 1
        %v740 = vmul.f32 %v733, %v736
        %v741 = vmul.f32 %v734, %v737
        %v742 = vld [vmem:[%s3] sm:$0xff]
        %v743 = vld [vmem:[%s3 + $0x8] sm:$0xff]
        %v744 = vld [vmem:[%s3 + $0x10] sm:$0xff]
        %v745 = vld [vmem:[%s3 + $0x18] sm:$0xff]
        %v746 = vld [vmem:[%s3 + $0x20] sm:$0xff]
        %v747 = vld [vmem:[%s3 + $0x28] sm:$0xff]
        %v748 = vld [vmem:[%s3 + $0x30] sm:$0xff]
        %v749 = vld [vmem:[%s3 + $0x38] sm:$0xff]
        %v750 = vld [vmem:[%s3 + $0x40] sm:$0xff]
        %v751 = vld [vmem:[%s3 + $0x48] sm:$0xff]
        %v752 = vld [vmem:[%s3 + $0x50] sm:$0xff]
        %v753 = vld [vmem:[%s3 + $0x58] sm:$0xff]
        %v754 = vld [vmem:[%s3 + $0x60] sm:$0xff]
        %v755 = vld [vmem:[%s3 + $0x68] sm:$0xff]
        %v756 = vld [vmem:[%s3 + $0x70] sm:$0xff]
        %v757 = vld [vmem:[%s3 + $0x78] sm:$0xff]
        %v758 = vld [vmem:[%s3 + $0x80] sm:$0xff]
        %v759 = vld [vmem:[%s3 + $0x88] sm:$0xff]
        %v760 = vld [vmem:[%s3 + $0x90] sm:$0xff]
        %v761 = vld [vmem:[%s3 + $0x98] sm:$0xff]
        %v762 = vld [vmem:[%s3 + $0xa0] sm:$0xff]
        %v763 = vld [vmem:[%s3 + $0xa8] sm:$0xff]
        %v764 = vld [vmem:[%s3 + $0xb0] sm:$0xff]
        %v765 = vld [vmem:[%s3 + $0xb8] sm:$0xff]
        %v766 = vld [vmem:[%s3 + $0xc0] sm:$0xff]
        %v767 = vld [vmem:[%s3 + $0xc8] sm:$0xff]
        %v768 = vld [vmem:[%s3 + $0xd0] sm:$0xff]
        %v769 = vld [vmem:[%s3 + $0xd8] sm:$0xff]
        %v770 = vld [vmem:[%s3 + $0xe0] sm:$0xff]
        %v771 = vld [vmem:[%s3 + $0xe8] sm:$0xff]
        %v772 = vld [vmem:[%s3 + $0xf0] sm:$0xff]
        %v773 = vld [vmem:[%s3 + $0xf8] sm:$0xff]
        %774 = vmatpush.msra.mxu0 %v757
        %775 = vmatpush.msra.mxu0 %v756
        %776 = vmatpush.msra.mxu0 %v755
        %777 = vmatpush.msra.mxu0 %v754
        %778 = vmatpush.msra.mxu0 %v753
        %779 = vmatpush.msra.mxu0 %v752
        %780 = vmatpush.msra.mxu0 %v751
        %781 = vmatpush.msra.mxu0 %v750
        %782 = vmatpush.msra.mxu0 %v749
        %783 = vmatpush.msra.mxu0 %v748
        %784 = vmatpush.msra.mxu0 %v747
        %785 = vmatpush.msra.mxu0 %v746
        %786 = vmatpush.msra.mxu0 %v745
        %787 = vmatpush.msra.mxu0 %v744
        %788 = vmatpush.msra.mxu0 %v743
        %789 = vmatpush.msra.mxu0 %v742
        %790 = vmatmul.f32.gmra.mxu0 %v740
        %v791 = vpop.f32.mrf.mxu0
        %v792 = vadd.f32 0.0, %v791
        %793 = vdwg.mxu0
        %794 = vmatpush.msra.mxu0 %v773
        %795 = vmatpush.msra.mxu0 %v772
        %796 = vmatpush.msra.mxu0 %v771
        %797 = vmatpush.msra.mxu0 %v770
        %798 = vmatpush.msra.mxu0 %v769
        %799 = vmatpush.msra.mxu0 %v768
        %800 = vmatpush.msra.mxu0 %v767
        %801 = vmatpush.msra.mxu0 %v766
        %802 = vmatpush.msra.mxu0 %v765
        %803 = vmatpush.msra.mxu0 %v764
        %804 = vmatpush.msra.mxu0 %v763
        %805 = vmatpush.msra.mxu0 %v762
        %806 = vmatpush.msra.mxu0 %v761
        %807 = vmatpush.msra.mxu0 %v760
        %808 = vmatpush.msra.mxu0 %v759
        %809 = vmatpush.msra.mxu0 %v758
        %810 = vmatmul.f32.gmra.mxu0 %v741
        %v811 = vpop.f32.mrf.mxu0
        %v812 = vadd.f32 %v792, %v811
        %813 = vdwg.mxu0
        %v814 = vadd.f32 %v679, %v812
        %v815 = vsel %vm276, %v814, 0.0
        %v816 = vrot.slane %v815, 4
        %v817 = vadd.f32 %v815, %v816
        %v818 = vrot.slane %v817, 2
        %v819 = vadd.f32 %v817, %v818
        %v820 = vrot.slane %v819, 1
        %v821 = vadd.f32 %v819, %v820
        %v822 = vmul.f32 %v821, %v646
        %v823 = vmul.f32 %v814, %v814
        %v824 = vsel %vm276, %v823, 0.0
        %v825 = vrot.slane %v824, 4
        %v826 = vadd.f32 %v824, %v825
        %v827 = vrot.slane %v826, 2
        %v828 = vadd.f32 %v826, %v827
        %v829 = vrot.slane %v828, 1
        %v830 = vadd.f32 %v828, %v829
        %v831 = vmul.f32 %v830, %v646
        %v832 = vmul.f32 %v822, %v822
        %v833 = vsub.f32 %v831, %v832
        %v834 = vadd.f32 %v833, 1e-05
        %v835 = vrsqrt.pop %v834
        %v836 = vmul.f32 %v835, %v834
        %v837 = vmul.f32 %v836, %v835
        %v838 = vmul.f32 0.5, %v837
        %v839 = vsub.f32 1.5, %v838
        %v840 = vmul.f32 %v835, %v839
        %vm841 = vweird.f32 %v834
        %vm842 = vweird.f32 %v835
        %vm843 = vmor %vm841, %vm842
        %v844 = vsel %vm843, %v835, %v840
        %v845 = vmul.f32 %v844, %v265
        %v846 = vmul.f32 %v822, %v845
        %v848 = vrot.slane %v846, 7
        %v850 = vsub.f32 %v265, %v848
        %v851 = vperm.slane %v845, 3
        %v852 = vmul.f32 %v814, %v851
        %v853 = vperm.slane %v850, 4
        %v854 = vadd.f32 %v852, %v853
        %855 = vst.msk [vmem:[%s255] sm:$0xff] %vm276, %v854
        %s856 = sand.u32 %s164, 1
        %s857 = scalar_lea.sflag [#allocation3], %s856
        %s858 = sand.u32 %s164, 1
        %s859 = smul.addr %s858, 8
        %s860 = scalar_lea.vmem [#allocation2], %s859
        // Predicated region
        $region45: #{encoder_layer.1} parent=43 // pred_check
          %p861 = pneg %p174
        $region46: #{encoder_layer.1} parent=43 // pred_check_branch
          %863 = sbr.rel (%p861) target = $region48
        $region47: #{encoder_layer.1} parent=43 // pred_region
          %865 = vsyncadd %s857, 0
          %s866 = smul.addr %s20, 8
          %s867 = scalar_lea.hbm %s6, %s866
          %s869 = sshll.u32 %s860, 4
          %s870 = int_to_ptr.vmem [resolvable:$true] %s869
          %s871 = sshll.u32 %s867, 4
          %s872 = int_to_ptr.hbm [resolvable:$true] %s871
          %874 = dma.vmem_to_hbm [thread:$0]  %s870, 128, %s872, %s857
        $region48: #{encoder_layer.1} parent=43 // pred_fallthru
          _
      $region44: #{encoder_layer.1} parent=5 // pred_fallthru
        _
      %p875 = scmp.le.s32.totalorder 2, %s15
      // Predicated region
      $region49: #{encoder_layer.1} parent=5 // pred_check
        %p876 = pneg %p875
      $region50: #{encoder_layer.1} parent=5 // pred_check_branch
        %878 = sbr.rel (%p876) target = $region52
      $region51: #{encoder_layer.1} parent=5 // pred_region
        %s879 = ssub.s32 %s15, 2
        // Predicated region
        $region53: #{encoder_layer.1} parent=51 // pred_check
          %p880 = pneg %p180
        $region54: #{encoder_layer.1} parent=51 // pred_check_branch
          %882 = sbr.rel (%p880) target = $region56
        $region55: #{encoder_layer.1} parent=51 // pred_region
          %s883 = sand.u32 %s165, 1
          %s884 = scalar_lea.sflag [#allocation3], %s883
          %s885 = sand.u32 %s165, 1
          %s886 = smul.addr %s885, 8
          %s887 = scalar_lea.vmem [#allocation2], %s886
          %889 = dma.done %s884, 128
        $region56: #{encoder_layer.1} parent=51 // pred_fallthru
          _
      $region52: #{encoder_layer.1} parent=5 // pred_fallthru
        _
    $region6: #{encoder_layer.1} parent=1 // loop_footer
      %s19 = sadd.s32 1, %s15
    $region7: #{encoder_layer.1} parent=1 // loop_footer_branch
      %14 = sbr.rel target = $region3
    $region8: #{encoder_layer.1} parent=1 // loop_exit
      _
    %890 = vsyncpa [#allocation3], 1
    %s891 = scalar_lea.sflag [#allocation3], 1
    %892 = vsyncpa %s891, 1

</llo_original>
